<compile_context>
chip_gen: v6e
topology: v6e:2x2x1
jax: 0.10.0
libtpu: 0.0.40
codegen_flags: <defaults>
</compile_context>

<pallas_src>
import functools

import numpy as np

import jax
import jax.numpy as jnp
from jax.experimental import pallas as pl
from jax.experimental.pallas import tpu as pltpu


# ----------------------------------------------------------------------------
# Kernel
# ----------------------------------------------------------------------------
def _sdpa_kernel(*refs, scale, compute_dtype, causal, return_attn, tq):
    """One (TB head-slices, TQ query rows) tile of scaled dot-product attention.

    Ref order (inputs, outputs, scratch):
      q_ref    (TB, TQ, D)
      k_ref    (TB, S,  D)    resident across the q-tile grid axis
      v_ref    (TB, S,  D)
      mask_ref (1|TB, TQ, S)  int8  [only when not causal]
      out_ref  (TB, TQ, D)
      attn_ref (TB, TQ, S)          [only when return_attn]
      kc_ref   (TB, S,  D)    bf16 scratch (cast once per head-group)
      vc_ref   (TB, S,  D)    bf16 scratch
    """
    it = iter(refs)
    q_ref = next(it)
    k_ref = next(it)
    v_ref = next(it)
    mask_ref = None if causal else next(it)
    out_ref = next(it)
    attn_ref = next(it) if return_attn else None
    kc_ref = next(it)
    vc_ref = next(it)

    qi = pl.program_id(1)

    # K/V are resident across q tiles: cast them to the MXU dtype only once
    # per head-group instead of repeating the VALU cast on every q tile.
    @pl.when(qi == 0)
    def _():
        kc_ref[...] = k_ref[...].astype(compute_dtype)
        vc_ref[...] = v_ref[...].astype(compute_dtype)

    # Fold 1/sqrt(d_k) into the small Q tile (S*D work, not S*S).
    q = (q_ref[...] * scale).astype(compute_dtype)                 # (TB, TQ, D)

    # scores = (q / sqrt(d_k)) @ k^T; contraction over D (no K transpose).
    scores = jnp.einsum("bqd,bkd->bqk", q, kc_ref[...],
                        preferred_element_type=jnp.float32)        # (TB, TQ, S)

    if causal:
        # Generate the causal mask in-registers: zero mask DMA per step.
        row = qi * tq + jax.lax.broadcasted_iota(jnp.int32, scores.shape, 1)
        col = jax.lax.broadcasted_iota(jnp.int32, scores.shape, 2)
        masked = col > row
    else:
        masked = mask_ref[...] != 0                                # broadcasts over TB
    scores = jnp.where(masked, jnp.float32(-1e9), scores)

    # Numerically stable softmax over keys (torch.nn.Softmax(dim=-1)).
    m = jnp.max(scores, axis=-1, keepdims=True)
    e = jnp.exp(scores - m)
    denom = jnp.sum(e, axis=-1, keepdims=True)

    if return_attn:
        # Exact normalization for the returned weights (strict softmax parity).
        weights = e / denom
        attn_ref[...] = weights.astype(attn_ref.dtype)             # dropout = identity (eval)
        out = jnp.einsum("bqk,bkd->bqd", weights.astype(compute_dtype),
                         vc_ref[...], preferred_element_type=jnp.float32)
    else:
        # Normalize after the matmul: a (TQ, D)-wide scale with the EUP
        # approximate reciprocal (free slot) instead of a (TQ, S) divide.
        out = jnp.einsum("bqk,bkd->bqd", e.astype(compute_dtype),
                         vc_ref[...], preferred_element_type=jnp.float32)
        out = out * pl.reciprocal(denom, approx=True)
    out_ref[...] = out.astype(out_ref.dtype)


# ----------------------------------------------------------------------------
# Generation-aware tiling / budgeting
# ----------------------------------------------------------------------------
def _round_up(n, m):
    return ((n + m - 1) // m) * m


def _tpu_vmem_bytes():
    """Best-effort physical VMEM capacity query."""
    try:
        cap = int(getattr(pltpu.get_tpu_info(), "vmem_capacity_bytes", 0))
        if cap > 0:
            return cap
    except Exception:
        pass
    try:
        kind = jax.devices()[0].device_kind.lower()
        if "v5" in kind or "v6" in kind:
            return 128 * 1024 * 1024
    except Exception:
        pass
    return 64 * 1024 * 1024          # conservative (v7x-sized) default


def _is_v5_or_older():
    try:
        kind = jax.devices()[0].device_kind.lower()
        return ("v5" in kind) or ("v4" in kind) or ("v3" in kind)
    except Exception:
        return False


def _vmem_budgets():
    """(per-step block budget, vmem_limit_bytes) for this generation."""
    cap = _tpu_vmem_bytes()
    if cap >= 96 * 1024 * 1024:                      # v5e / v6e: 128 MiB physical
        return 40 * 1024 * 1024, 96 * 1024 * 1024
    return 20 * 1024 * 1024, 52 * 1024 * 1024        # v7x: 64 MiB physical


def _block_bytes(tb, tq, s, d, *, in_bytes, out_bytes, attn_bytes, mask_tb,
                 compute_bytes=2):
    """Per-grid-step VMEM estimate: double-buffered DMA blocks + bf16 K/V
    scratch + in-kernel temporaries, with (8,128) layout padding."""
    d_p = _round_up(d, 128)          # lane padding of minor dims
    s_p = _round_up(s, 128)
    tq8 = _round_up(tq, 8)
    s8 = _round_up(s, 8)
    # Pipeline DMA buffers (double-buffered).
    dma = tb * s8 * d_p * in_bytes * 2                 # K, V inputs
    dma += tb * tq8 * d_p * (in_bytes + out_bytes)     # Q in + out tile
    dma += mask_tb * tq8 * s_p                         # int8 mask tile (0 if causal)
    dma += tb * tq8 * s_p * attn_bytes                 # attn-weights output tile
    dma *= 2
    # bf16 K/V residency scratch (single-buffered).
    scratch = 2 * tb * s8 * d_p * compute_bytes
    # Live temporaries: scores, e, weights (f32) + bf16 copy, q/out tiles.
    temps = tb * tq8 * s_p * (4 + 4 + 4 + compute_bytes)
    temps += tb * tq8 * d_p * (compute_bytes + 4)
    return dma + scratch + temps


def _choose_tiles(bh, s, d, *, in_bytes, out_bytes, attn_bytes, mask_shared,
                  causal, budget):
    # Query-tile size: fill the MXU M dimension (256 on v6e/v7x, 128 on v5e)
    # when S permits, otherwise take the whole sequence.
    tq = s
    tq_candidates = (128,) if _is_v5_or_older() else (256, 128)
    for cand in tq_candidates:
        if s > cand and s % cand == 0:
            tq = cand
            break

    # Heads-per-step: largest divisor of BH fitting the per-step VMEM budget.
    # Keep BH // TB >= 2 so the (parallel) head axis can split across the two
    # TensorCores of a v7x megacore without breaking K/V residency.
    divisors = [t for t in range(1, bh + 1) if bh % t == 0]
    if bh >= 2:
        divisors = [t for t in divisors if bh // t >= 2] or [1]
    tb = 1
    for cand in sorted(divisors, reverse=True):
        mask_tb = 0 if causal else (1 if mask_shared else cand)
        if _block_bytes(cand, tq, s, d, in_bytes=in_bytes, out_bytes=out_bytes,
                        attn_bytes=attn_bytes, mask_tb=mask_tb) <= budget:
            tb = cand
            break
    return tb, tq


def _detect_causal(attn_mask, s):
    """True iff attn_mask is a *concrete* standard causal mask shared over (B,H)."""
    if attn_mask is None:
        return False
    shape = tuple(attn_mask.shape)
    if len(shape) < 2 or shape[-2:] != (s, s):
        return False
    if len(shape) > 2 and any(int(x) != 1 for x in shape[:-2]):
        return False
    try:
        m = np.asarray(attn_mask).reshape(s, s).astype(bool)
    except Exception:
        return False                                   # traced: cannot inspect
    return bool(np.array_equal(m, np.triu(np.ones((s, s), dtype=bool), k=1)))


# ----------------------------------------------------------------------------
# Wrapper (forward of the PyTorch module)
# ----------------------------------------------------------------------------
def scaled_dot_product_attention(q, k, v, attn_mask=None, *, d_k,
                                 attn_pdrop=0.0,
                                 compute_dtype=jnp.bfloat16,
                                 attn_weights_dtype=jnp.bfloat16,
                                 return_attn_weights=True,
                                 is_causal=None):
    """q, k, v: [B, H, S, D]; attn_mask broadcastable to [B, H, S, S]
    (bool/int, nonzero => masked with -1e9).

    Returns (output [B,H,S,D], attn_weights [B,H,S,S]) like the PyTorch module
    (weights stored in `attn_weights_dtype`, bf16 by default since that stream
    dominates HBM traffic), or just `output` when return_attn_weights=False.
    """
    del attn_pdrop  # TODO(synk): training-mode dropout not wired in; nn.Dropout is identity in eval.

    B, H, S, D = q.shape
    BH = B * H
    scale = 1.0 / (d_k ** 0.5)

    if is_causal is None:
        is_causal = _detect_causal(attn_mask, S)
    if not is_causal and attn_mask is None:
        raise ValueError("attn_mask is required unless is_causal=True")

    in_bytes = jnp.dtype(q.dtype).itemsize
    out_bytes = jnp.dtype(q.dtype).itemsize
    attn_bytes = jnp.dtype(attn_weights_dtype).itemsize if return_attn_weights else 0

    mask_shared = True
    if not is_causal:
        mshape = attn_mask.shape
        mask_shared = attn_mask.ndim <= 2 or all(int(x) == 1 for x in mshape[:-2])

    budget, vmem_limit = _vmem_budgets()
    TB, TQ = _choose_tiles(BH, S, D, in_bytes=in_bytes, out_bytes=out_bytes,
                           attn_bytes=attn_bytes, mask_shared=mask_shared,
                           causal=is_causal, budget=budget)

    qf = q.reshape(BH, S, D)
    kf = k.reshape(BH, S, D)
    vf = v.reshape(BH, S, D)

    in_arrays = [qf, kf, vf]
    in_specs = [
        pl.BlockSpec((TB, TQ, D), lambda g, qi: (g, qi, 0)),   # Q tile
        pl.BlockSpec((TB, S, D), lambda g, qi: (g, 0, 0)),     # K (resident over qi)
        pl.BlockSpec((TB, S, D), lambda g, qi: (g, 0, 0)),     # V (resident over qi)
    ]
    mask_bytes_hbm = 0
    if not is_causal:
        if mask_shared:
            maskf = jnp.reshape(attn_mask, (1, S, S)).astype(jnp.int8)
            in_specs.append(pl.BlockSpec((1, TQ, S), lambda g, qi: (0, qi, 0)))
        else:
            maskf = jnp.broadcast_to(attn_mask, (B, H, S, S)) \
                       .reshape(BH, S, S).astype(jnp.int8)
            in_specs.append(pl.BlockSpec((TB, TQ, S), lambda g, qi: (g, qi, 0)))
        in_arrays.append(maskf)
        mask_bytes_hbm = int(maskf.size)

    out_shapes = [jax.ShapeDtypeStruct((BH, S, D), q.dtype)]
    out_specs = [pl.BlockSpec((TB, TQ, D), lambda g, qi: (g, qi, 0))]
    if return_attn_weights:
        out_shapes.append(jax.ShapeDtypeStruct((BH, S, S), attn_weights_dtype))
        out_specs.append(pl.BlockSpec((TB, TQ, S), lambda g, qi: (g, qi, 0)))

    kernel = functools.partial(_sdpa_kernel, scale=scale,
                               compute_dtype=compute_dtype,
                               causal=is_causal,
                               return_attn=return_attn_weights, tq=TQ)

    cost = pl.CostEstimate(
        flops=4 * BH * S * S * D,
        transcendentals=BH * S * S,
        bytes_accessed=(3 * BH * S * D * in_bytes + BH * S * D * out_bytes
                        + BH * S * S * attn_bytes + mask_bytes_hbm),
    )

    results = pl.pallas_call(
        kernel,
        out_shape=tuple(out_shapes),
        grid_spec=pltpu.PrefetchScalarGridSpec(
            num_scalar_prefetch=0,
            grid=(BH // TB, S // TQ),
            in_specs=in_specs,
            out_specs=out_specs,
            scratch_shapes=[pltpu.VMEM((TB, S, D), compute_dtype),
                            pltpu.VMEM((TB, S, D), compute_dtype)],
        ),
        compiler_params=pltpu.CompilerParams(
            # Head axis parallel (megacore split on v7x); q-tile axis arbitrary
            # so K/V residency is never broken by splitting it across cores.
            dimension_semantics=("parallel", "arbitrary"),
            vmem_limit_bytes=vmem_limit,
        ),
        cost_estimate=cost,
    )(*in_arrays)

    if return_attn_weights:
        out_f, attn_f = results
        return out_f.reshape(B, H, S, D), attn_f.reshape(B, H, S, S)
    out_f = results[0] if isinstance(results, (tuple, list)) else results
    return out_f.reshape(B, H, S, D)


# ----------------------------------------------------------------------------
# Pure-JAX reference (mirrors the kernel's bf16-operand / f32-accumulate math)
# ----------------------------------------------------------------------------
def _reference(q, k, v, attn_mask, d_k, compute_dtype=jnp.bfloat16):
    scale = 1.0 / (d_k ** 0.5)
    qc = (q * scale).astype(compute_dtype).astype(jnp.float32)
    kc = k.astype(compute_dtype).astype(jnp.float32)
    vc = v.astype(compute_dtype).astype(jnp.float32)
    scores = jnp.einsum("bhqd,bhkd->bhqk", qc, kc,
                        precision=jax.lax.Precision.HIGHEST)
    scores = jnp.where(attn_mask, -1e9, scores)
    weights = jax.nn.softmax(scores, axis=-1)
    wc = weights.astype(compute_dtype).astype(jnp.float32)
    out = jnp.einsum("bhqk,bhkd->bhqd", wc, vc,
                     precision=jax.lax.Precision.HIGHEST)
    return out, weights


if __name__ == "__main__":
    B, H, S, D = 2, 4, 8, 32  # d_k = 32
    key = jax.random.PRNGKey(0)
    kq, kk, kv = jax.random.split(key, 3)

    q = jax.random.normal(kq, (B, H, S, D), dtype=jnp.float32)
    k = jax.random.normal(kk, (B, H, S, D), dtype=jnp.float32)
    v = jax.random.normal(kv, (B, H, S, D), dtype=jnp.float32)

    # 1) Causal mask shared across (batch, head): detected from the concrete
    #    array and generated in-kernel (zero mask DMA).
    causal = jnp.triu(jnp.ones((S, S), dtype=jnp.bool_), k=1)
    full_causal = jnp.broadcast_to(causal, (B, H, S, S))
    ref_out, ref_w = _reference(q, k, v, full_causal, D)

    out, attn_w = scaled_dot_product_attention(q, k, v, causal[None, None], d_k=D)
    jax.block_until_ready((out, attn_w))
    assert jnp.allclose(out, ref_out, atol=1e-2, rtol=1e-2)
    assert jnp.allclose(attn_w.astype(jnp.float32), ref_w, atol=1e-2, rtol=1e-2)

    # 2) Arbitrary per-(batch, head) mask (dense int8 on the wire).
    rand_mask = jax.random.bernoulli(jax.random.PRNGKey(1), 0.3, (B, H, S, S))
    rand_mask = rand_mask.at[..., 0].set(False)   # keep >= 1 key unmasked per row
    ref_out2, ref_w2 = _reference(q, k, v, rand_mask, D)
    out2, attn_w2 = scaled_dot_product_attention(q, k, v, rand_mask, d_k=D)
    jax.block_until_ready((out2, attn_w2))
    assert jnp.allclose(out2, ref_out2, atol=1e-2, rtol=1e-2)
    assert jnp.allclose(attn_w2.astype(jnp.float32), ref_w2, atol=1e-2, rtol=1e-2)

    # 3) Shared-but-not-causal mask ((1,1,S,S) int8 slab) + output-only fast
    #    path (no S x S attention-weights writeback, approx-reciprocal scaling).
    pad_mask = jnp.zeros((1, 1, S, S), dtype=jnp.bool_).at[..., -2:].set(True)
    ref_out3, _ = _reference(q, k, v, jnp.broadcast_to(pad_mask, (B, H, S, S)), D)
    out3 = scaled_dot_product_attention(q, k, v, pad_mask, d_k=D,
                                        return_attn_weights=False)
    jax.block_until_ready(out3)
    assert jnp.allclose(out3, ref_out3, atol=1e-2, rtol=1e-2)

    print("KERNEL_OK")
</pallas_src>

<mosaic_0001>
module attributes {stable_mosaic.version = 11 : i64} {
  func.func @_sdpa_kernel(%arg0: i32, %arg1: i32, %arg2: memref<4x8x32xf32, #tpu.memory_space<vmem>>, %arg3: memref<4x8x32xf32, #tpu.memory_space<vmem>>, %arg4: memref<4x8x32xf32, #tpu.memory_space<vmem>>, %arg5: memref<4x8x32xf32, #tpu.memory_space<vmem>>, %arg6: memref<4x8x8xbf16, #tpu.memory_space<vmem>>, %arg7: memref<4x8x32xbf16, #tpu.memory_space<vmem>>, %arg8: memref<4x8x32xbf16, #tpu.memory_space<vmem>>) attributes {dimension_semantics = [#tpu.dimension_semantics<parallel>, #tpu.dimension_semantics<arbitrary>], iteration_bounds = array<i64: 2, 1>, scalar_prefetch = 0 : i64, scratch_operands = 2 : i64, tpu.core_type = #tpu.core_type<tc>, window_params = [{transform_indices = @transform_0, window_bounds = array<i64: 4, 8, 32>}, {transform_indices = @transform_1, window_bounds = array<i64: 4, 8, 32>}, {transform_indices = @transform_2, window_bounds = array<i64: 4, 8, 32>}, {transform_indices = @transform_3, window_bounds = array<i64: 4, 8, 32>}, {transform_indices = @transform_4, window_bounds = array<i64: 4, 8, 8>}]} {
    %c0_i32 = arith.constant 0 : i32
    %0 = arith.cmpi eq, %arg1, %c0_i32 : i32
    %1 = arith.extui %0 : i1 to i32
    %c0_i32_0 = arith.constant 0 : i32
    %2 = arith.cmpi ne, %1, %c0_i32_0 : i32
    scf.if %2 {
      %c0_20 = arith.constant 0 : index
      %c0_21 = arith.constant 0 : index
      %c0_22 = arith.constant 0 : index
      %32 = vector.load %arg3[%c0_20, %c0_21, %c0_22] : memref<4x8x32xf32, #tpu.memory_space<vmem>>, vector<4x8x32xf32>
      %33 = arith.truncf %32 : vector<4x8x32xf32> to vector<4x8x32xbf16>
      %c0_23 = arith.constant 0 : index
      %c0_24 = arith.constant 0 : index
      %c0_25 = arith.constant 0 : index
      %34 = vector.load %arg7[%c0_23, %c0_24, %c0_25] : memref<4x8x32xbf16, #tpu.memory_space<vmem>>, vector<4x8x32xbf16>
      tpu.vector_store %arg7[%c0_23, %c0_24, %c0_25], %33 {strides = array<i32>} : memref<4x8x32xbf16, #tpu.memory_space<vmem>>, vector<4x8x32xbf16>,
      %c0_26 = arith.constant 0 : index
      %c0_27 = arith.constant 0 : index
      %c0_28 = arith.constant 0 : index
      %35 = vector.load %arg4[%c0_26, %c0_27, %c0_28] : memref<4x8x32xf32, #tpu.memory_space<vmem>>, vector<4x8x32xf32>
      %36 = arith.truncf %35 : vector<4x8x32xf32> to vector<4x8x32xbf16>
      %c0_29 = arith.constant 0 : index
      %c0_30 = arith.constant 0 : index
      %c0_31 = arith.constant 0 : index
      %37 = vector.load %arg8[%c0_29, %c0_30, %c0_31] : memref<4x8x32xbf16, #tpu.memory_space<vmem>>, vector<4x8x32xbf16>
      tpu.vector_store %arg8[%c0_29, %c0_30, %c0_31], %36 {strides = array<i32>} : memref<4x8x32xbf16, #tpu.memory_space<vmem>>, vector<4x8x32xbf16>,
    } else {
    }
    %c0 = arith.constant 0 : index
    %c0_1 = arith.constant 0 : index
    %c0_2 = arith.constant 0 : index
    %3 = vector.load %arg2[%c0, %c0_1, %c0_2] : memref<4x8x32xf32, #tpu.memory_space<vmem>>, vector<4x8x32xf32>
    %cst = arith.constant 0.176776692 : f32
    %4 = vector.broadcast %cst : f32 to vector<4x8x32xf32>
    %5 = arith.mulf %3, %4 : vector<4x8x32xf32>
    %6 = arith.truncf %5 : vector<4x8x32xf32> to vector<4x8x32xbf16>
    %c0_3 = arith.constant 0 : index
    %c0_4 = arith.constant 0 : index
    %c0_5 = arith.constant 0 : index
    %7 = vector.load %arg7[%c0_3, %c0_4, %c0_5] : memref<4x8x32xbf16, #tpu.memory_space<vmem>>, vector<4x8x32xbf16>
    "tpu.trace_start"() <{level = 10 : i32, message = "bqd,bkd->bqk"}> : () -> ()
    %cst_6 = arith.constant dense<0.000000e+00> : vector<4x8x8xf32>
    %8 = tpu.matmul %6, %7, %cst_6 {dimension_numbers = #tpu.dot_dimension_numbers<[2], [2], [1], [1], [0, 0, 0, 1, 1, 1], [0], [0]>} : vector<4x8x32xbf16>, vector<4x8x32xbf16>, vector<4x8x8xf32> -> vector<4x8x8xf32>
    "tpu.trace_stop"() : () -> ()
    %c8_i32 = arith.constant 8 : i32
    %9 = arith.muli %arg1, %c8_i32 : i32
    %10 = tpu.iota {dimensions = array<i32: 1>} : vector<4x8x8xi32>
    %11 = vector.broadcast %9 : i32 to vector<4x8x8xi32>
    %12 = arith.addi %11, %10 : vector<4x8x8xi32>
    %13 = tpu.iota {dimensions = array<i32: 2>} : vector<4x8x8xi32>
    %14 = arith.cmpi sgt, %13, %12 : vector<4x8x8xi32>
    %cst_7 = arith.constant -1.000000e+09 : f32
    %15 = vector.broadcast %cst_7 : f32 to vector<4x8x8xf32>
    %16 = arith.select %14, %15, %8 : vector<4x8x8xi1>, vector<4x8x8xf32>
    %cst_8 = arith.constant dense<0xFF800000> : vector<4x8xf32>
    %17 = vector.multi_reduction <maximumf>, %16, %cst_8 [2] : vector<4x8x8xf32> to vector<4x8xf32>
    %18 = vector.shape_cast %17 : vector<4x8xf32> to vector<4x8x1xf32>
    %19 = vector.broadcast %18 : vector<4x8x1xf32> to vector<4x8x8xf32>
    %20 = arith.subf %16, %19 : vector<4x8x8xf32>
    %21 = math.exp %20 : vector<4x8x8xf32>
    %cst_9 = arith.constant dense<0.000000e+00> : vector<4x8xf32>
    %22 = vector.multi_reduction <add>, %21, %cst_9 [2] : vector<4x8x8xf32> to vector<4x8xf32>
    %23 = vector.shape_cast %22 : vector<4x8xf32> to vector<4x8x1xf32>
    %24 = vector.broadcast %23 : vector<4x8x1xf32> to vector<4x8x8xf32>
    %25 = arith.divf %21, %24 : vector<4x8x8xf32>
    %26 = arith.truncf %25 : vector<4x8x8xf32> to vector<4x8x8xbf16>
    %c0_10 = arith.constant 0 : index
    %c0_11 = arith.constant 0 : index
    %c0_12 = arith.constant 0 : index
    %27 = vector.load %arg6[%c0_10, %c0_11, %c0_12] : memref<4x8x8xbf16, #tpu.memory_space<vmem>>, vector<4x8x8xbf16>
    tpu.vector_store %arg6[%c0_10, %c0_11, %c0_12], %26 {strides = array<i32>} : memref<4x8x8xbf16, #tpu.memory_space<vmem>>, vector<4x8x8xbf16>,
    %28 = arith.truncf %25 : vector<4x8x8xf32> to vector<4x8x8xbf16>
    %c0_13 = arith.constant 0 : index
    %c0_14 = arith.constant 0 : index
    %c0_15 = arith.constant 0 : index
    %29 = vector.load %arg8[%c0_13, %c0_14, %c0_15] : memref<4x8x32xbf16, #tpu.memory_space<vmem>>, vector<4x8x32xbf16>
    "tpu.trace_start"() <{level = 10 : i32, message = "bqk,bkd->bqd"}> : () -> ()
    %cst_16 = arith.constant dense<0.000000e+00> : vector<4x8x32xf32>
    %30 = tpu.matmul %28, %29, %cst_16 {dimension_numbers = #tpu.dot_dimension_numbers<[2], [1], [1], [2], [0, 0, 0, 1, 1, 2], [0], [0]>} : vector<4x8x8xbf16>, vector<4x8x32xbf16>, vector<4x8x32xf32> -> vector<4x8x32xf32>
    "tpu.trace_stop"() : () -> ()
    %c0_17 = arith.constant 0 : index
    %c0_18 = arith.constant 0 : index
    %c0_19 = arith.constant 0 : index
    %31 = vector.load %arg5[%c0_17, %c0_18, %c0_19] : memref<4x8x32xf32, #tpu.memory_space<vmem>>, vector<4x8x32xf32>
    tpu.vector_store %arg5[%c0_17, %c0_18, %c0_19], %30 {strides = array<i32>} : memref<4x8x32xf32, #tpu.memory_space<vmem>>, vector<4x8x32xf32>,
    return
  }
  func.func @transform_0(%arg0: i32, %arg1: i32) -> (i32, i32, i32) {
    %c0_i32 = arith.constant 0 : i32
    %c0_i32_0 = arith.constant 0 : i32
    return %arg0, %arg1, %c0_i32 : i32, i32, i32
  }
  func.func @transform_1(%arg0: i32, %arg1: i32) -> (i32, i32, i32) {
    %c0_i32 = arith.constant 0 : i32
    %c0_i32_0 = arith.constant 0 : i32
    %c0_i32_1 = arith.constant 0 : i32
    return %arg0, %c0_i32, %c0_i32_0 : i32, i32, i32
  }
  func.func @transform_2(%arg0: i32, %arg1: i32) -> (i32, i32, i32) {
    %c0_i32 = arith.constant 0 : i32
    %c0_i32_0 = arith.constant 0 : i32
    %c0_i32_1 = arith.constant 0 : i32
    return %arg0, %c0_i32, %c0_i32_0 : i32, i32, i32
  }
  func.func @transform_3(%arg0: i32, %arg1: i32) -> (i32, i32, i32) {
    %c0_i32 = arith.constant 0 : i32
    %c0_i32_0 = arith.constant 0 : i32
    return %arg0, %arg1, %c0_i32 : i32, i32, i32
  }
  func.func @transform_4(%arg0: i32, %arg1: i32) -> (i32, i32, i32) {
    %c0_i32 = arith.constant 0 : i32
    %c0_i32_0 = arith.constant 0 : i32
    return %arg0, %arg1, %c0_i32 : i32, i32, i32
  }
}

</mosaic_0001>

<llo_original>
// kernel: tpu_custom_call.1
$region0: #{tpu_custom_call.1}
  #allocation0 [shape = 'u32[]', space=smem, size = 0x4, offset = 0x4, fixed_abs, tag = 'smem constant byte address 0x4 - core index']
  #allocation1 [shape = 'u32[144,128]{1,0:T(1,128)}', space=vmem, size = 0x12000, scoped, tag = 'internal scratch']
  #allocation2 [shape = 'bf16[4,8,32]{2,1,0:T(8,128)(2,1)}', space=vmem, size = 0x2000, scoped, tag = 'scratch operand']
  #allocation3 [shape = 'bf16[4,8,32]{2,1,0:T(8,128)(2,1)}', space=vmem, size = 0x2000, scoped, tag = 'scratch operand']
  %s0 = inlined_call_operand.hbm [shape: f32[8,8,32], index: 0, kind: input, shape index: {}]
  %s1 = inlined_call_operand.hbm [shape: f32[8,8,32], index: 1, kind: input, shape index: {}]
  %s2 = inlined_call_operand.hbm [shape: f32[8,8,32], index: 2, kind: input, shape index: {}]
  %s3 = inlined_call_operand.hbm [shape: f32[8,8,32], index: 3, kind: output, shape index: {0}]
  %s4 = inlined_call_operand.hbm [shape: bf16[8,8,8], index: 4, kind: output, shape index: {1}]
  %5 = xla_tuple %s3, %s4
  %s6 = sld [smem:[#allocation0]]
  $region69: #{tpu_custom_call.1} parent=0
    _
  %s8 = ssub.s32 1, %s6
  %s9 = scalar_select 0, %s8, %s6
  $region1: #{tpu_custom_call.1} parent=0
    #allocation4 [shape = 'u8[32768]{0}', space=vmem, size = 0x8000, scoped, tag = 'input window, operand 0']
    #allocation5 [shape = 's32[2]{0}', space=sflag, size = 0x8, scoped, tag = 'scoped memory for tpu_custom_call.1']
    #allocation6 [shape = 's32[2]{0}', space=sflag, size = 0x8, scoped, tag = 'scoped memory for tpu_custom_call.1']
    #allocation7 [shape = 'u8[32768]{0}', space=vmem, size = 0x8000, scoped, tag = 'input window, operand 1']
    #allocation8 [shape = 's32[2]{0}', space=sflag, size = 0x8, scoped, tag = 'scoped memory for tpu_custom_call.1']
    #allocation9 [shape = 'u8[32768]{0}', space=vmem, size = 0x8000, scoped, tag = 'input window, operand 2']
    #allocation10 [shape = 'u8[32768]{0}', space=vmem, size = 0x8000, scoped, tag = 'output window, operand 0']
    #allocation11 [shape = 'u8[16384]{0}', space=vmem, size = 0x4000, scoped, tag = 'output window, operand 1']
    #allocation12 [shape = 's32[2]{0}', space=sflag, size = 0x8, scoped, tag = 'scoped memory for tpu_custom_call.1']
    %10 = vsyncpa [#allocation5], 0
    %s11 = scalar_lea.sflag [#allocation5], 1
    %12 = vsyncpa %s11, 0
    %13 = vsyncpa [#allocation8], 0
    %s14 = scalar_lea.sflag [#allocation8], 1
    %15 = vsyncpa %s14, 0
    %16 = vsyncpa [#allocation6], 0
    %s17 = scalar_lea.sflag [#allocation6], 1
    %18 = vsyncpa %s17, 0
    %19 = vsyncpa [#allocation12], 0
    %s20 = scalar_lea.sflag [#allocation12], 1
    %21 = vsyncpa %s20, 0
    loop: start=0, step=1, limit=4
    $region2: #{tpu_custom_call.1} parent=1 // loop_pre_header
      _
    $region3: #{tpu_custom_call.1} parent=1 // loop_header
      %s23 = sphi 0, %s27
      %p24 = scmp.ge.s32.totalorder %s23, 4
      %s30 = sphi 0, %s42
      %s31 = sphi 0, %s38
      %s32 = sphi 0, %s30
      %s33 = sphi 0, %s31
      %s34 = sphi 0, %s32
      %s35 = sphi 0, %s33
      %s47 = sphi 0, %s49
      %s50 = sphi 0, %s47
      %s51 = sphi 0, %s50
      %s67 = sphi 0, %s51
      %s73 = sphi 0, %s75
      %s76 = sphi 0, %s73
      %s77 = sphi 0, %s76
      %s93 = sphi 0, %s77
      %s99 = sphi 0, %s101
      %s102 = sphi 0, %s99
      %s103 = sphi 0, %s102
      %s119 = sphi 0, %s103
      %s127 = sphi 0, %s129
      %s130 = sphi 0, %s127
      %s131 = sphi 0, %s130
      %s147 = sphi 0, %s131
      %s155 = sphi 0, %s157
      %s158 = sphi 0, %s155
      %s159 = sphi 0, %s158
      %s175 = sphi 0, %s159
    $region4: #{tpu_custom_call.1} parent=1 // loop_header_branch
      %26 = sbr.rel (%p24) target = $region8
    $region5: #{tpu_custom_call.1} parent=1 // loop_body
      %s28 = ssub.s32 %s23, 1
      %s29 = ssub.s32 %s23, 2
      %s36 = sadd.s32 1, %s31
      %p37 = scmp.ge.s32.totalorder %s36, 1
      %s38 = scalar_select %p37, 0, %s36
      %s39 = sadd.s32 1, %s30
      %s40 = scalar_select %p37, %s39, %s30
      %p41 = scmp.ge.s32.totalorder %s40, 2
      %s42 = scalar_select %p41, 0, %s40
      %s43 = ssub.s32 %s30, %s42
      %s44 = ssub.s32 %s31, %s38
      %s45 = sor.u32 %s43, %s44
      %p46 = scmp.eq.s32.totalorder %s45, 0
      %s48 = sadd.s32 %s47, 1
      %s49 = scalar_select %p46, %s47, %s48
      %p52 = pneg %p46
      %p53 = scmp.eq.s32.totalorder %s23, 1
      %p54 = por %p52, %p53
      %p55 = scmp.ne.s32.totalorder %s47, %s50
      %p56 = scmp.eq.s32.totalorder %s23, 0
      %p57 = por %p55, %p56
      %p58 = scmp.ne.s32.totalorder %s47, %s50
      %p59 = scmp.eq.s32.totalorder %s28, 1
      %p60 = por %p58, %p59
      %p61 = scmp.ne.s32.totalorder %s50, %s51
      %p62 = scmp.eq.s32.totalorder %s28, 0
      %p63 = por %p61, %p62
      %p64 = scmp.ne.s32.totalorder %s50, %s51
      %p65 = scmp.eq.s32.totalorder %s29, 1
      %p66 = por %p64, %p65
      %p68 = scmp.ne.s32.totalorder %s51, %s67
      %p69 = scmp.eq.s32.totalorder %s29, 0
      %p70 = por %p68, %p69
      %s71 = ssub.s32 %s30, %s42
      %p72 = scmp.eq.s32.totalorder %s71, 0
      %s74 = sadd.s32 %s73, 1
      %s75 = scalar_select %p72, %s73, %s74
      %p78 = pneg %p72
      %p79 = scmp.eq.s32.totalorder %s23, 1
      %p80 = por %p78, %p79
      %p81 = scmp.ne.s32.totalorder %s73, %s76
      %p82 = scmp.eq.s32.totalorder %s23, 0
      %p83 = por %p81, %p82
      %p84 = scmp.ne.s32.totalorder %s73, %s76
      %p85 = scmp.eq.s32.totalorder %s28, 1
      %p86 = por %p84, %p85
      %p87 = scmp.ne.s32.totalorder %s76, %s77
      %p88 = scmp.eq.s32.totalorder %s28, 0
      %p89 = por %p87, %p88
      %p90 = scmp.ne.s32.totalorder %s76, %s77
      %p91 = scmp.eq.s32.totalorder %s29, 1
      %p92 = por %p90, %p91
      %p94 = scmp.ne.s32.totalorder %s77, %s93
      %p95 = scmp.eq.s32.totalorder %s29, 0
      %p96 = por %p94, %p95
      %s97 = ssub.s32 %s30, %s42
      %p98 = scmp.eq.s32.totalorder %s97, 0
      %s100 = sadd.s32 %s99, 1
      %s101 = scalar_select %p98, %s99, %s100
      %p104 = pneg %p98
      %p105 = scmp.eq.s32.totalorder %s23, 1
      %p106 = por %p104, %p105
      %p107 = scmp.ne.s32.totalorder %s99, %s102
      %p108 = scmp.eq.s32.totalorder %s23, 0
      %p109 = por %p107, %p108
      %p110 = scmp.ne.s32.totalorder %s99, %s102
      %p111 = scmp.eq.s32.totalorder %s28, 1
      %p112 = por %p110, %p111
      %p113 = scmp.ne.s32.totalorder %s102, %s103
      %p114 = scmp.eq.s32.totalorder %s28, 0
      %p115 = por %p113, %p114
      %p116 = scmp.ne.s32.totalorder %s102, %s103
      %p117 = scmp.eq.s32.totalorder %s29, 1
      %p118 = por %p116, %p117
      %p120 = scmp.ne.s32.totalorder %s103, %s119
      %p121 = scmp.eq.s32.totalorder %s29, 0
      %p122 = por %p120, %p121
      %s123 = ssub.s32 %s30, %s42
      %s124 = ssub.s32 %s31, %s38
      %s125 = sor.u32 %s123, %s124
      %p126 = scmp.eq.s32.totalorder %s125, 0
      %s128 = sadd.s32 %s127, 1
      %s129 = scalar_select %p126, %s127, %s128
      %p132 = pneg %p126
      %p133 = scmp.eq.s32.totalorder %s23, 1
      %p134 = por %p132, %p133
      %p135 = scmp.ne.s32.totalorder %s127, %s130
      %p136 = scmp.eq.s32.totalorder %s23, 0
      %p137 = por %p135, %p136
      %p138 = scmp.ne.s32.totalorder %s127, %s130
      %p139 = scmp.eq.s32.totalorder %s28, 1
      %p140 = por %p138, %p139
      %p141 = scmp.ne.s32.totalorder %s130, %s131
      %p142 = scmp.eq.s32.totalorder %s28, 0
      %p143 = por %p141, %p142
      %p144 = scmp.ne.s32.totalorder %s130, %s131
      %p145 = scmp.eq.s32.totalorder %s29, 1
      %p146 = por %p144, %p145
      %p148 = scmp.ne.s32.totalorder %s131, %s147
      %p149 = scmp.eq.s32.totalorder %s29, 0
      %p150 = por %p148, %p149
      %s151 = ssub.s32 %s30, %s42
      %s152 = ssub.s32 %s31, %s38
      %s153 = sor.u32 %s151, %s152
      %p154 = scmp.eq.s32.totalorder %s153, 0
      %s156 = sadd.s32 %s155, 1
      %s157 = scalar_select %p154, %s155, %s156
      %p160 = pneg %p154
      %p161 = scmp.eq.s32.totalorder %s23, 1
      %p162 = por %p160, %p161
      %p163 = scmp.ne.s32.totalorder %s155, %s158
      %p164 = scmp.eq.s32.totalorder %s23, 0
      %p165 = por %p163, %p164
      %p166 = scmp.ne.s32.totalorder %s155, %s158
      %p167 = scmp.eq.s32.totalorder %s28, 1
      %p168 = por %p166, %p167
      %p169 = scmp.ne.s32.totalorder %s158, %s159
      %p170 = scmp.eq.s32.totalorder %s28, 0
      %p171 = por %p169, %p170
      %p172 = scmp.ne.s32.totalorder %s158, %s159
      %p173 = scmp.eq.s32.totalorder %s29, 1
      %p174 = por %p172, %p173
      %p176 = scmp.ne.s32.totalorder %s159, %s175
      %p177 = scmp.eq.s32.totalorder %s29, 0
      %p178 = por %p176, %p177
      %p179 = scmp.le.s32.totalorder 1, %s23
      %p180 = scmp.lt.s32.totalorder %s23, 3
      %p181 = pnand %p179, %p180
      %p182 = pneg %p181
      // Predicated region
      $region9: #{tpu_custom_call.1} parent=5 // pred_check
        _
      $region10: #{tpu_custom_call.1} parent=5 // pred_check_branch
        %184 = sbr.rel (%p181) target = $region12
      $region11: #{tpu_custom_call.1} parent=5 // pred_region
        %s185 = ssub.s32 %s23, 1
      $region12: #{tpu_custom_call.1} parent=5 // pred_fallthru
        _
      %p186 = scmp.lt.s32.totalorder %s23, 2
      // Predicated region
      $region13: #{tpu_custom_call.1} parent=5 // pred_check
        %p187 = pneg %p186
      $region14: #{tpu_custom_call.1} parent=5 // pred_check_branch
        %189 = sbr.rel (%p187) target = $region16
      $region15: #{tpu_custom_call.1} parent=5 // pred_region
        // Predicated region
        $region17: #{tpu_custom_call.1} parent=15 // pred_check
          %p190 = pneg %p57
        $region18: #{tpu_custom_call.1} parent=15 // pred_check_branch
          %192 = sbr.rel (%p190) target = $region20
        $region19: #{tpu_custom_call.1} parent=15 // pred_region
          %s193 = sand.u32 %s47, 1
          %s194 = scalar_lea.sflag [#allocation5], %s193
          %s195 = sand.u32 %s47, 1
          %s196 = smul.addr %s195, 32
          %s197 = scalar_lea.vmem [#allocation4], %s196
          %s198 = smul.u32 4, %s30
          %s200 = ssub.s32 512, 512
          %201 = vsyncadd %s194, %s200
          %s202 = sadd.s32 %s31, %s198
          %s203 = smul.addr %s202, 128
          %s204 = scalar_lea.hbm %s0, %s203
          %s205 = sshll.u32 %s197, 4
          %s206 = int_to_ptr.vmem [resolvable:$true] %s205
          %211 = dma.hbm_to_vmem [thread:$0]  %s204, 512, %s206, %s194, 128, 128, 8
        $region20: #{tpu_custom_call.1} parent=15 // pred_fallthru
          _
        // Predicated region
        $region21: #{tpu_custom_call.1} parent=15 // pred_check
          %p212 = pneg %p83
        $region22: #{tpu_custom_call.1} parent=15 // pred_check_branch
          %214 = sbr.rel (%p212) target = $region24
        $region23: #{tpu_custom_call.1} parent=15 // pred_region
          %s215 = sand.u32 %s23, 1
          %s216 = scalar_lea.sflag [#allocation8], %s215
          %s217 = sand.u32 %s73, 1
          %s218 = smul.addr %s217, 32
          %s219 = scalar_lea.vmem [#allocation7], %s218
          %s220 = smul.u32 4, %s30
          %s222 = ssub.s32 512, 512
          %223 = vsyncadd %s216, %s222
          %s224 = smul.addr %s220, 128
          %s225 = scalar_lea.hbm %s1, %s224
          %s226 = sshll.u32 %s219, 4
          %s227 = int_to_ptr.vmem [resolvable:$true] %s226
          %232 = dma.hbm_to_vmem [thread:$0]  %s225, 512, %s227, %s216, 128, 128, 8
        $region24: #{tpu_custom_call.1} parent=15 // pred_fallthru
          _
        // Predicated region
        $region25: #{tpu_custom_call.1} parent=15 // pred_check
          %p233 = pneg %p109
        $region26: #{tpu_custom_call.1} parent=15 // pred_check_branch
          %235 = sbr.rel (%p233) target = $region28
        $region27: #{tpu_custom_call.1} parent=15 // pred_region
          %s236 = sand.u32 %s23, 1
          %s237 = scalar_lea.sflag [#allocation8], %s236
          %s238 = sand.u32 %s99, 1
          %s239 = smul.addr %s238, 32
          %s240 = scalar_lea.vmem [#allocation9], %s239
          %s241 = smul.u32 4, %s30
          %s243 = ssub.s32 512, 512
          %244 = vsyncadd %s237, %s243
          %s245 = smul.addr %s241, 128
          %s246 = scalar_lea.hbm %s2, %s245
          %s247 = sshll.u32 %s240, 4
          %s248 = int_to_ptr.vmem [resolvable:$true] %s247
          %253 = dma.hbm_to_vmem [thread:$0]  %s246, 512, %s248, %s237, 128, 128, 8
        $region28: #{tpu_custom_call.1} parent=15 // pred_fallthru
          _
      $region16: #{tpu_custom_call.1} parent=5 // pred_fallthru
        _
      %p254 = scmp.le.s32.totalorder 1, %s23
      %p255 = scmp.lt.s32.totalorder %s23, 3
      %p256 = pnand %p254, %p255
      %p257 = pneg %p256
      // Predicated region
      $region29: #{tpu_custom_call.1} parent=5 // pred_check
        _
      $region30: #{tpu_custom_call.1} parent=5 // pred_check_branch
        %259 = sbr.rel (%p256) target = $region32
      $region31: #{tpu_custom_call.1} parent=5 // pred_region
        %s260 = ssub.s32 %s23, 1
        %s261 = sand.u32 %s50, 1
        %s262 = scalar_lea.sflag [#allocation5], %s261
        %s263 = sand.u32 %s50, 1
        %s264 = smul.addr %s263, 32
        %s265 = scalar_lea.vmem [#allocation4], %s264
        // Predicated region
        $region33: #{tpu_custom_call.1} parent=31 // pred_check
          %p266 = pneg %p63
        $region34: #{tpu_custom_call.1} parent=31 // pred_check_branch
          %268 = sbr.rel (%p266) target = $region36
        $region35: #{tpu_custom_call.1} parent=31 // pred_region
          %269 = dma.done %s262, 512
        $region36: #{tpu_custom_call.1} parent=31 // pred_fallthru
          _
        %s270 = sand.u32 %s28, 1
        %s271 = scalar_lea.sflag [#allocation8], %s270
        %s272 = sand.u32 %s76, 1
        %s273 = smul.addr %s272, 32
        %s274 = scalar_lea.vmem [#allocation7], %s273
        // Predicated region
        $region37: #{tpu_custom_call.1} parent=31 // pred_check
          %p275 = pneg %p89
        $region38: #{tpu_custom_call.1} parent=31 // pred_check_branch
          %277 = sbr.rel (%p275) target = $region40
        $region39: #{tpu_custom_call.1} parent=31 // pred_region
          %278 = dma.done %s271, 512
        $region40: #{tpu_custom_call.1} parent=31 // pred_fallthru
          _
        %s279 = sand.u32 %s28, 1
        %s280 = scalar_lea.sflag [#allocation8], %s279
        %s281 = sand.u32 %s102, 1
        %s282 = smul.addr %s281, 32
        %s283 = scalar_lea.vmem [#allocation9], %s282
        // Predicated region
        $region41: #{tpu_custom_call.1} parent=31 // pred_check
          %p284 = pneg %p115
        $region42: #{tpu_custom_call.1} parent=31 // pred_check_branch
          %286 = sbr.rel (%p284) target = $region44
        $region43: #{tpu_custom_call.1} parent=31 // pred_region
          %287 = dma.done %s280, 512
        $region44: #{tpu_custom_call.1} parent=31 // pred_fallthru
          _
        %s288 = sand.u32 %s50, 1
        %s289 = scalar_lea.sflag [#allocation5], %s288
        %s290 = sand.u32 %s50, 1
        %s291 = smul.addr %s290, 32
        %s292 = scalar_lea.vmem [#allocation4], %s291
        %p293 = pneg %p63
        %p294 = pneg %p60
        %s295 = sand.u32 %s28, 1
        %s296 = scalar_lea.sflag [#allocation8], %s295
        %s297 = sand.u32 %s76, 1
        %s298 = smul.addr %s297, 32
        %s299 = scalar_lea.vmem [#allocation7], %s298
        %p300 = pneg %p89
        %p301 = pneg %p86
        %s302 = sand.u32 %s28, 1
        %s303 = scalar_lea.sflag [#allocation8], %s302
        %s304 = sand.u32 %s102, 1
        %s305 = smul.addr %s304, 32
        %s306 = scalar_lea.vmem [#allocation9], %s305
        %p307 = pneg %p115
        %p308 = pneg %p112
        %p309 = pneg %p143
        %p310 = pneg %p140
        %s311 = sand.u32 %s130, 1
        %s312 = scalar_lea.sflag [#allocation6], %s311
        %s313 = sand.u32 %s130, 1
        %s314 = smul.addr %s313, 32
        %s315 = scalar_lea.vmem [#allocation10], %s314
        %p316 = pneg %p171
        %p317 = pneg %p168
        %s318 = sand.u32 %s158, 1
        %s319 = scalar_lea.sflag [#allocation12], %s318
        %s320 = sand.u32 %s158, 1
        %s321 = smul.addr %s320, 16
        %s322 = scalar_lea.vmem [#allocation11], %s321
        %s323 = smul.u32 4, %s32
        %s324 = smul.u32 4, %s32
        %s325 = smul.u32 4, %s32
        %s326 = smul.u32 4, %s32
        %s327 = smul.u32 4, %s32
        %p329 = scmp.eq.s32.totalorder %s33, 0
        // Predicated region
        $region45: #{tpu_custom_call.1} parent=31 // pred_check
          %p330 = pneg %p329
        $region46: #{tpu_custom_call.1} parent=31 // pred_check_branch
          %332 = sbr.rel (%p330) target = $region48
        $region47: #{tpu_custom_call.1} parent=31 // pred_region
          %v333 = vld [vmem:[%s274] sm:$0xff]
          %v334 = vld [vmem:[%s274 + $0x8] sm:$0xff]
          %v335 = vld [vmem:[%s274 + $0x10] sm:$0xff]
          %v336 = vld [vmem:[%s274 + $0x18] sm:$0xff]
          %v337 = vpack.c.bf16 %v333, %v333
          %v338 = vpack.c.bf16 %v334, %v334
          %v339 = vpack.c.bf16 %v335, %v335
          %v340 = vpack.c.bf16 %v336, %v336
          %vm341 = vcmask 257024
          %342 = vst.msk [vmem:[#allocation2] sm:$0xf] %vm341, %v337
          %343 = vst.msk [vmem:[#allocation2 + $0x4] sm:$0xf] %vm341, %v338
          %344 = vst.msk [vmem:[#allocation2 + $0x8] sm:$0xf] %vm341, %v339
          %345 = vst.msk [vmem:[#allocation2 + $0xc] sm:$0xf] %vm341, %v340
          %v346 = vld [vmem:[%s283] sm:$0xff]
          %v347 = vld [vmem:[%s283 + $0x8] sm:$0xff]
          %v348 = vld [vmem:[%s283 + $0x10] sm:$0xff]
          %v349 = vld [vmem:[%s283 + $0x18] sm:$0xff]
          %v350 = vpack.c.bf16 %v346, %v346
          %v351 = vpack.c.bf16 %v347, %v347
          %v352 = vpack.c.bf16 %v348, %v348
          %v353 = vpack.c.bf16 %v349, %v349
          %354 = vst.msk [vmem:[#allocation3] sm:$0xf] %vm341, %v350
          %355 = vst.msk [vmem:[#allocation3 + $0x4] sm:$0xf] %vm341, %v351
          %356 = vst.msk [vmem:[#allocation3 + $0x8] sm:$0xf] %vm341, %v352
          %357 = vst.msk [vmem:[#allocation3 + $0xc] sm:$0xf] %vm341, %v353
        $region48: #{tpu_custom_call.1} parent=31 // pred_fallthru
          _
        %v358 = vld [vmem:[%s265] sm:$0xff]
        %v359 = vld [vmem:[%s265 + $0x8] sm:$0xff]
        %v360 = vld [vmem:[%s265 + $0x10] sm:$0xff]
        %v361 = vld [vmem:[%s265 + $0x18] sm:$0xff]
        %v362 = vmul.f32 %v358, 0.17677669
        %v363 = vmul.f32 %v359, 0.17677669
        %v364 = vmul.f32 %v360, 0.17677669
        %v365 = vmul.f32 %v361, 0.17677669
        %v366 = vpack.c.bf16 %v362, %v362
        %v367 = vpack.c.bf16 %v363, %v363
        %v368 = vpack.c.bf16 %v364, %v364
        %v369 = vpack.c.bf16 %v365, %v365
        %v370 = vld [vmem:[#allocation2] sm:$0xf]
        %v371 = vld [vmem:[#allocation2 + $0x4] sm:$0xf]
        %v372 = vld [vmem:[#allocation2 + $0x8] sm:$0xf]
        %v373 = vld [vmem:[#allocation2 + $0xc] sm:$0xf]
        %vm374 = vcmask 261120
        %v376 = vsel %vm374, %v366, 0
        %v379 = vsel %vm374, %v370, 0
        %381 = vmatprep.subr.bf16.mxu0 0
        %382 = vmatpush1.bf16.xpose.msra.mxu0 0
        %383 = vmatprep.subr.bf16.mxu0 0
        %384 = vmatpush1.bf16.xpose.msra.mxu0 0
        %385 = vmatprep.subr.bf16.mxu0 0
        %386 = vmatpush1.bf16.xpose.msra.mxu0 0
        %387 = vmatprep.subr.bf16.mxu0 0
        %388 = vmatpush1.bf16.xpose.msra.mxu0 0
        %389 = vmatprep.subr.bf16.mxu0 0
        %390 = vmatpush1.bf16.xpose.msra.mxu0 0
        %391 = vmatprep.subr.bf16.mxu0 0
        %392 = vmatpush1.bf16.xpose.msra.mxu0 0
        %393 = vmatprep.subr.bf16.mxu0 0
        %394 = vmatpush1.bf16.xpose.msra.mxu0 0
        %395 = vmatprep.subr.bf16.mxu0 0
        %396 = vmatpush1.bf16.xpose.msra.mxu0 %v379
        %397 = vmatprep.subr.bf16.mxu0 0
        %398 = vmatpush2.bf16.xpose.msra.mxu0 0
        %399 = vmatprep.subr.bf16.mxu0 0
        %400 = vmatpush2.bf16.xpose.msra.mxu0 0
        %401 = vmatprep.subr.bf16.mxu0 0
        %402 = vmatpush2.bf16.xpose.msra.mxu0 0
        %403 = vmatprep.subr.bf16.mxu0 0
        %404 = vmatpush2.bf16.xpose.msra.mxu0 0
        %405 = vmatprep.subr.bf16.mxu0 0
        %406 = vmatpush2.bf16.xpose.msra.mxu0 0
        %407 = vmatprep.subr.bf16.mxu0 0
        %408 = vmatpush2.bf16.xpose.msra.mxu0 0
        %409 = vmatprep.subr.bf16.mxu0 0
        %410 = vmatpush2.bf16.xpose.msra.mxu0 0
        %411 = vmatprep.subr.bf16.mxu0 0
        %412 = vmatpush2.bf16.xpose.msra.mxu0 0
        %413 = vmatprep.mubr.bf16.mxu0 0
        %414 = vmatmul.mubr.bf16.gmra.mxu0 %v376
        %v415 = vpop.f32.mrf.mxu0
        %v416 = vadd.f32 0.0, %v415
        %v417 = vpop.f32.mrf.mxu0
        %v418 = vpop.f32.mrf.mxu0
        %v419 = vpop.f32.mrf.mxu0
        %420 = vdwg.mxu0
        %v422 = vsel %vm374, %v367, 0
        %v425 = vsel %vm374, %v371, 0
        %427 = vmatprep.subr.bf16.mxu0 0
        %428 = vmatpush1.bf16.xpose.msra.mxu0 0
        %429 = vmatprep.subr.bf16.mxu0 0
        %430 = vmatpush1.bf16.xpose.msra.mxu0 0
        %431 = vmatprep.subr.bf16.mxu0 0
        %432 = vmatpush1.bf16.xpose.msra.mxu0 0
        %433 = vmatprep.subr.bf16.mxu0 0
        %434 = vmatpush1.bf16.xpose.msra.mxu0 0
        %435 = vmatprep.subr.bf16.mxu0 0
        %436 = vmatpush1.bf16.xpose.msra.mxu0 0
        %437 = vmatprep.subr.bf16.mxu0 0
        %438 = vmatpush1.bf16.xpose.msra.mxu0 0
        %439 = vmatprep.subr.bf16.mxu0 0
        %440 = vmatpush1.bf16.xpose.msra.mxu0 0
        %441 = vmatprep.subr.bf16.mxu0 0
        %442 = vmatpush1.bf16.xpose.msra.mxu0 %v425
        %443 = vmatprep.subr.bf16.mxu0 0
        %444 = vmatpush2.bf16.xpose.msra.mxu0 0
        %445 = vmatprep.subr.bf16.mxu0 0
        %446 = vmatpush2.bf16.xpose.msra.mxu0 0
        %447 = vmatprep.subr.bf16.mxu0 0
        %448 = vmatpush2.bf16.xpose.msra.mxu0 0
        %449 = vmatprep.subr.bf16.mxu0 0
        %450 = vmatpush2.bf16.xpose.msra.mxu0 0
        %451 = vmatprep.subr.bf16.mxu0 0
        %452 = vmatpush2.bf16.xpose.msra.mxu0 0
        %453 = vmatprep.subr.bf16.mxu0 0
        %454 = vmatpush2.bf16.xpose.msra.mxu0 0
        %455 = vmatprep.subr.bf16.mxu0 0
        %456 = vmatpush2.bf16.xpose.msra.mxu0 0
        %457 = vmatprep.subr.bf16.mxu0 0
        %458 = vmatpush2.bf16.xpose.msra.mxu0 0
        %459 = vmatprep.mubr.bf16.mxu0 0
        %460 = vmatmul.mubr.bf16.gmra.mxu0 %v422
        %v461 = vpop.f32.mrf.mxu0
        %v462 = vadd.f32 0.0, %v461
        %v463 = vpop.f32.mrf.mxu0
        %v464 = vpop.f32.mrf.mxu0
        %v465 = vpop.f32.mrf.mxu0
        %466 = vdwg.mxu0
        %v468 = vsel %vm374, %v368, 0
        %v471 = vsel %vm374, %v372, 0
        %473 = vmatprep.subr.bf16.mxu0 0
        %474 = vmatpush1.bf16.xpose.msra.mxu0 0
        %475 = vmatprep.subr.bf16.mxu0 0
        %476 = vmatpush1.bf16.xpose.msra.mxu0 0
        %477 = vmatprep.subr.bf16.mxu0 0
        %478 = vmatpush1.bf16.xpose.msra.mxu0 0
        %479 = vmatprep.subr.bf16.mxu0 0
        %480 = vmatpush1.bf16.xpose.msra.mxu0 0
        %481 = vmatprep.subr.bf16.mxu0 0
        %482 = vmatpush1.bf16.xpose.msra.mxu0 0
        %483 = vmatprep.subr.bf16.mxu0 0
        %484 = vmatpush1.bf16.xpose.msra.mxu0 0
        %485 = vmatprep.subr.bf16.mxu0 0
        %486 = vmatpush1.bf16.xpose.msra.mxu0 0
        %487 = vmatprep.subr.bf16.mxu0 0
        %488 = vmatpush1.bf16.xpose.msra.mxu0 %v471
        %489 = vmatprep.subr.bf16.mxu0 0
        %490 = vmatpush2.bf16.xpose.msra.mxu0 0
        %491 = vmatprep.subr.bf16.mxu0 0
        %492 = vmatpush2.bf16.xpose.msra.mxu0 0
        %493 = vmatprep.subr.bf16.mxu0 0
        %494 = vmatpush2.bf16.xpose.msra.mxu0 0
        %495 = vmatprep.subr.bf16.mxu0 0
        %496 = vmatpush2.bf16.xpose.msra.mxu0 0
        %497 = vmatprep.subr.bf16.mxu0 0
        %498 = vmatpush2.bf16.xpose.msra.mxu0 0
        %499 = vmatprep.subr.bf16.mxu0 0
        %500 = vmatpush2.bf16.xpose.msra.mxu0 0
        %501 = vmatprep.subr.bf16.mxu0 0
        %502 = vmatpush2.bf16.xpose.msra.mxu0 0
        %503 = vmatprep.subr.bf16.mxu0 0
        %504 = vmatpush2.bf16.xpose.msra.mxu0 0
        %505 = vmatprep.mubr.bf16.mxu0 0
        %506 = vmatmul.mubr.bf16.gmra.mxu0 %v468
        %v507 = vpop.f32.mrf.mxu0
        %v508 = vadd.f32 0.0, %v507
        %v509 = vpop.f32.mrf.mxu0
        %v510 = vpop.f32.mrf.mxu0
        %v511 = vpop.f32.mrf.mxu0
        %512 = vdwg.mxu0
        %v514 = vsel %vm374, %v369, 0
        %v517 = vsel %vm374, %v373, 0
        %519 = vmatprep.subr.bf16.mxu0 0
        %520 = vmatpush1.bf16.xpose.msra.mxu0 0
        %521 = vmatprep.subr.bf16.mxu0 0
        %522 = vmatpush1.bf16.xpose.msra.mxu0 0
        %523 = vmatprep.subr.bf16.mxu0 0
        %524 = vmatpush1.bf16.xpose.msra.mxu0 0
        %525 = vmatprep.subr.bf16.mxu0 0
        %526 = vmatpush1.bf16.xpose.msra.mxu0 0
        %527 = vmatprep.subr.bf16.mxu0 0
        %528 = vmatpush1.bf16.xpose.msra.mxu0 0
        %529 = vmatprep.subr.bf16.mxu0 0
        %530 = vmatpush1.bf16.xpose.msra.mxu0 0
        %531 = vmatprep.subr.bf16.mxu0 0
        %532 = vmatpush1.bf16.xpose.msra.mxu0 0
        %533 = vmatprep.subr.bf16.mxu0 0
        %534 = vmatpush1.bf16.xpose.msra.mxu0 %v517
        %535 = vmatprep.subr.bf16.mxu0 0
        %536 = vmatpush2.bf16.xpose.msra.mxu0 0
        %537 = vmatprep.subr.bf16.mxu0 0
        %538 = vmatpush2.bf16.xpose.msra.mxu0 0
        %539 = vmatprep.subr.bf16.mxu0 0
        %540 = vmatpush2.bf16.xpose.msra.mxu0 0
        %541 = vmatprep.subr.bf16.mxu0 0
        %542 = vmatpush2.bf16.xpose.msra.mxu0 0
        %543 = vmatprep.subr.bf16.mxu0 0
        %544 = vmatpush2.bf16.xpose.msra.mxu0 0
        %545 = vmatprep.subr.bf16.mxu0 0
        %546 = vmatpush2.bf16.xpose.msra.mxu0 0
        %547 = vmatprep.subr.bf16.mxu0 0
        %548 = vmatpush2.bf16.xpose.msra.mxu0 0
        %549 = vmatprep.subr.bf16.mxu0 0
        %550 = vmatpush2.bf16.xpose.msra.mxu0 0
        %551 = vmatprep.mubr.bf16.mxu0 0
        %552 = vmatmul.mubr.bf16.gmra.mxu0 %v514
        %v553 = vpop.f32.mrf.mxu0
        %v554 = vadd.f32 0.0, %v553
        %v555 = vpop.f32.mrf.mxu0
        %v556 = vpop.f32.mrf.mxu0
        %v557 = vpop.f32.mrf.mxu0
        %558 = vdwg.mxu0
        %s559 = smul.u32 %s33, 8
        %v560 = vlaneseq
        %v561 = vshrl.u32 %v560, 7
        %v562 = vstv %s559
        %v563 = vadd.s32 %v562, %v561
        %v564 = vlaneseq
        %v565 = vand.u32 %v564, 127
        %vm566 = vcmp.gt.s32.totalorder %v565, %v563
        %v567 = vsel %vm566, -1e+09, %v416
        %v568 = vsel %vm566, -1e+09, %v462
        %v569 = vsel %vm566, -1e+09, %v508
        %v570 = vsel %vm566, -1e+09, %v554
        %vm571 = vcmask 64512
        %v572 = vsel %vm571, %v567, -inf
        %573 = vmax.xlane.f32.xlu0 %v572
        %v574 = vpop.xlane.xlu0 %573
        %v575 = vsel %vm571, %v568, -inf
        %576 = vmax.xlane.f32.xlu0 %v575
        %v577 = vpop.xlane.xlu0 %576
        %v578 = vsel %vm571, %v569, -inf
        %579 = vmax.xlane.f32.xlu0 %v578
        %v580 = vpop.xlane.xlu0 %579
        %v581 = vsel %vm571, %v570, -inf
        %582 = vmax.xlane.f32.xlu0 %v581
        %v583 = vpop.xlane.xlu0 %582
        %v584 = vsub.f32 %v567, %v574
        %v585 = vsub.f32 %v568, %v577
        %v586 = vsub.f32 %v569, %v580
        %v587 = vsub.f32 %v570, %v583
        %v588 = vmul.f32 %v584, 1.442695
        %v589 = vpow.pop %v588
        %v590 = vmul.f32 %v585, 1.442695
        %v591 = vpow.pop %v590
        %v592 = vmul.f32 %v586, 1.442695
        %v593 = vpow.pop %v592
        %v594 = vmul.f32 %v587, 1.442695
        %v595 = vpow.pop %v594
        %v596 = vsel %vm571, %v589, 0.0
        %597 = vadd.xlane.f32.xlu0 %v596
        %v598 = vpop.xlane.xlu0 %597
        %v599 = vsel %vm571, %v591, 0.0
        %600 = vadd.xlane.f32.xlu0 %v599
        %v601 = vpop.xlane.xlu0 %600
        %v602 = vsel %vm571, %v593, 0.0
        %603 = vadd.xlane.f32.xlu0 %v602
        %v604 = vpop.xlane.xlu0 %603
        %v605 = vsel %vm571, %v595, 0.0
        %606 = vadd.xlane.f32.xlu0 %v605
        %v607 = vpop.xlane.xlu0 %606
        %v608 = vrcp.pop %v598
        %v609 = vmul.f32 %v589, %v608
        %v610 = vrcp.pop %v601
        %v611 = vmul.f32 %v591, %v610
        %v612 = vrcp.pop %v604
        %v613 = vmul.f32 %v593, %v612
        %v614 = vrcp.pop %v607
        %v615 = vmul.f32 %v595, %v614
        %v616 = vpack.c.bf16 %v609, %v609
        %v617 = vpack.c.bf16 %v611, %v611
        %v618 = vpack.c.bf16 %v613, %v613
        %v619 = vpack.c.bf16 %v615, %v615
        %vm620 = vcmask 60416
        %621 = vst.msk [vmem:[%s322] sm:$0xf] %vm620, %v616
        %622 = vst.msk [vmem:[%s322 + $0x4] sm:$0xf] %vm620, %v617
        %623 = vst.msk [vmem:[%s322 + $0x8] sm:$0xf] %vm620, %v618
        %624 = vst.msk [vmem:[%s322 + $0xc] sm:$0xf] %vm620, %v619
        %v625 = vld [vmem:[#allocation3] sm:$0xf]
        %v626 = vld [vmem:[#allocation3 + $0x4] sm:$0xf]
        %v627 = vld [vmem:[#allocation3 + $0x8] sm:$0xf]
        %v628 = vld [vmem:[#allocation3 + $0xc] sm:$0xf]
        %v630 = vsel %vm571, %v616, 0
        %vm632 = vcmask 1043456
        %v634 = vsel %vm632, %v625, 0
        %636 = vmatprep.subr.bf16.mxu0 0
        %637 = vmatpush1.bf16.msra.mxu0 0
        %638 = vmatprep.subr.bf16.mxu0 0
        %639 = vmatpush1.bf16.msra.mxu0 0
        %640 = vmatprep.subr.bf16.mxu0 0
        %641 = vmatpush1.bf16.msra.mxu0 0
        %642 = vmatprep.subr.bf16.mxu0 0
        %643 = vmatpush1.bf16.msra.mxu0 0
        %644 = vmatprep.subr.bf16.mxu0 0
        %645 = vmatpush1.bf16.msra.mxu0 0
        %646 = vmatprep.subr.bf16.mxu0 0
        %647 = vmatpush1.bf16.msra.mxu0 0
        %648 = vmatprep.subr.bf16.mxu0 0
        %649 = vmatpush1.bf16.msra.mxu0 0
        %650 = vmatprep.subr.bf16.mxu0 0
        %651 = vmatpush1.bf16.msra.mxu0 %v634
        %652 = vmatprep.subr.bf16.mxu0 0
        %653 = vmatpush2.bf16.msra.mxu0 0
        %654 = vmatprep.subr.bf16.mxu0 0
        %655 = vmatpush2.bf16.msra.mxu0 0
        %656 = vmatprep.subr.bf16.mxu0 0
        %657 = vmatpush2.bf16.msra.mxu0 0
        %658 = vmatprep.subr.bf16.mxu0 0
        %659 = vmatpush2.bf16.msra.mxu0 0
        %660 = vmatprep.subr.bf16.mxu0 0
        %661 = vmatpush2.bf16.msra.mxu0 0
        %662 = vmatprep.subr.bf16.mxu0 0
        %663 = vmatpush2.bf16.msra.mxu0 0
        %664 = vmatprep.subr.bf16.mxu0 0
        %665 = vmatpush2.bf16.msra.mxu0 0
        %666 = vmatprep.subr.bf16.mxu0 0
        %667 = vmatpush2.bf16.msra.mxu0 0
        %668 = vmatprep.mubr.bf16.mxu0 0
        %669 = vmatmul.mubr.bf16.gmra.mxu0 %v630
        %v670 = vpop.f32.mrf.mxu0
        %v671 = vadd.f32 0.0, %v670
        %v672 = vpop.f32.mrf.mxu0
        %v673 = vpop.f32.mrf.mxu0
        %v674 = vpop.f32.mrf.mxu0
        %675 = vdwg.mxu0
        %v677 = vsel %vm571, %v617, 0
        %v680 = vsel %vm632, %v626, 0
        %682 = vmatprep.subr.bf16.mxu0 0
        %683 = vmatpush1.bf16.msra.mxu0 0
        %684 = vmatprep.subr.bf16.mxu0 0
        %685 = vmatpush1.bf16.msra.mxu0 0
        %686 = vmatprep.subr.bf16.mxu0 0
        %687 = vmatpush1.bf16.msra.mxu0 0
        %688 = vmatprep.subr.bf16.mxu0 0
        %689 = vmatpush1.bf16.msra.mxu0 0
        %690 = vmatprep.subr.bf16.mxu0 0
        %691 = vmatpush1.bf16.msra.mxu0 0
        %692 = vmatprep.subr.bf16.mxu0 0
        %693 = vmatpush1.bf16.msra.mxu0 0
        %694 = vmatprep.subr.bf16.mxu0 0
        %695 = vmatpush1.bf16.msra.mxu0 0
        %696 = vmatprep.subr.bf16.mxu0 0
        %697 = vmatpush1.bf16.msra.mxu0 %v680
        %698 = vmatprep.subr.bf16.mxu0 0
        %699 = vmatpush2.bf16.msra.mxu0 0
        %700 = vmatprep.subr.bf16.mxu0 0
        %701 = vmatpush2.bf16.msra.mxu0 0
        %702 = vmatprep.subr.bf16.mxu0 0
        %703 = vmatpush2.bf16.msra.mxu0 0
        %704 = vmatprep.subr.bf16.mxu0 0
        %705 = vmatpush2.bf16.msra.mxu0 0
        %706 = vmatprep.subr.bf16.mxu0 0
        %707 = vmatpush2.bf16.msra.mxu0 0
        %708 = vmatprep.subr.bf16.mxu0 0
        %709 = vmatpush2.bf16.msra.mxu0 0
        %710 = vmatprep.subr.bf16.mxu0 0
        %711 = vmatpush2.bf16.msra.mxu0 0
        %712 = vmatprep.subr.bf16.mxu0 0
        %713 = vmatpush2.bf16.msra.mxu0 0
        %714 = vmatprep.mubr.bf16.mxu0 0
        %715 = vmatmul.mubr.bf16.gmra.mxu0 %v677
        %v716 = vpop.f32.mrf.mxu0
        %v717 = vadd.f32 0.0, %v716
        %v718 = vpop.f32.mrf.mxu0
        %v719 = vpop.f32.mrf.mxu0
        %v720 = vpop.f32.mrf.mxu0
        %721 = vdwg.mxu0
        %v723 = vsel %vm571, %v618, 0
        %v726 = vsel %vm632, %v627, 0
        %728 = vmatprep.subr.bf16.mxu0 0
        %729 = vmatpush1.bf16.msra.mxu0 0
        %730 = vmatprep.subr.bf16.mxu0 0
        %731 = vmatpush1.bf16.msra.mxu0 0
        %732 = vmatprep.subr.bf16.mxu0 0
        %733 = vmatpush1.bf16.msra.mxu0 0
        %734 = vmatprep.subr.bf16.mxu0 0
        %735 = vmatpush1.bf16.msra.mxu0 0
        %736 = vmatprep.subr.bf16.mxu0 0
        %737 = vmatpush1.bf16.msra.mxu0 0
        %738 = vmatprep.subr.bf16.mxu0 0
        %739 = vmatpush1.bf16.msra.mxu0 0
        %740 = vmatprep.subr.bf16.mxu0 0
        %741 = vmatpush1.bf16.msra.mxu0 0
        %742 = vmatprep.subr.bf16.mxu0 0
        %743 = vmatpush1.bf16.msra.mxu0 %v726
        %744 = vmatprep.subr.bf16.mxu0 0
        %745 = vmatpush2.bf16.msra.mxu0 0
        %746 = vmatprep.subr.bf16.mxu0 0
        %747 = vmatpush2.bf16.msra.mxu0 0
        %748 = vmatprep.subr.bf16.mxu0 0
        %749 = vmatpush2.bf16.msra.mxu0 0
        %750 = vmatprep.subr.bf16.mxu0 0
        %751 = vmatpush2.bf16.msra.mxu0 0
        %752 = vmatprep.subr.bf16.mxu0 0
        %753 = vmatpush2.bf16.msra.mxu0 0
        %754 = vmatprep.subr.bf16.mxu0 0
        %755 = vmatpush2.bf16.msra.mxu0 0
        %756 = vmatprep.subr.bf16.mxu0 0
        %757 = vmatpush2.bf16.msra.mxu0 0
        %758 = vmatprep.subr.bf16.mxu0 0
        %759 = vmatpush2.bf16.msra.mxu0 0
        %760 = vmatprep.mubr.bf16.mxu0 0
        %761 = vmatmul.mubr.bf16.gmra.mxu0 %v723
        %v762 = vpop.f32.mrf.mxu0
        %v763 = vadd.f32 0.0, %v762
        %v764 = vpop.f32.mrf.mxu0
        %v765 = vpop.f32.mrf.mxu0
        %v766 = vpop.f32.mrf.mxu0
        %767 = vdwg.mxu0
        %v769 = vsel %vm571, %v619, 0
        %v772 = vsel %vm632, %v628, 0
        %774 = vmatprep.subr.bf16.mxu0 0
        %775 = vmatpush1.bf16.msra.mxu0 0
        %776 = vmatprep.subr.bf16.mxu0 0
        %777 = vmatpush1.bf16.msra.mxu0 0
        %778 = vmatprep.subr.bf16.mxu0 0
        %779 = vmatpush1.bf16.msra.mxu0 0
        %780 = vmatprep.subr.bf16.mxu0 0
        %781 = vmatpush1.bf16.msra.mxu0 0
        %782 = vmatprep.subr.bf16.mxu0 0
        %783 = vmatpush1.bf16.msra.mxu0 0
        %784 = vmatprep.subr.bf16.mxu0 0
        %785 = vmatpush1.bf16.msra.mxu0 0
        %786 = vmatprep.subr.bf16.mxu0 0
        %787 = vmatpush1.bf16.msra.mxu0 0
        %788 = vmatprep.subr.bf16.mxu0 0
        %789 = vmatpush1.bf16.msra.mxu0 %v772
        %790 = vmatprep.subr.bf16.mxu0 0
        %791 = vmatpush2.bf16.msra.mxu0 0
        %792 = vmatprep.subr.bf16.mxu0 0
        %793 = vmatpush2.bf16.msra.mxu0 0
        %794 = vmatprep.subr.bf16.mxu0 0
        %795 = vmatpush2.bf16.msra.mxu0 0
        %796 = vmatprep.subr.bf16.mxu0 0
        %797 = vmatpush2.bf16.msra.mxu0 0
        %798 = vmatprep.subr.bf16.mxu0 0
        %799 = vmatpush2.bf16.msra.mxu0 0
        %800 = vmatprep.subr.bf16.mxu0 0
        %801 = vmatpush2.bf16.msra.mxu0 0
        %802 = vmatprep.subr.bf16.mxu0 0
        %803 = vmatpush2.bf16.msra.mxu0 0
        %804 = vmatprep.subr.bf16.mxu0 0
        %805 = vmatpush2.bf16.msra.mxu0 0
        %806 = vmatprep.mubr.bf16.mxu0 0
        %807 = vmatmul.mubr.bf16.gmra.mxu0 %v769
        %v808 = vpop.f32.mrf.mxu0
        %v809 = vadd.f32 0.0, %v808
        %v810 = vpop.f32.mrf.mxu0
        %v811 = vpop.f32.mrf.mxu0
        %v812 = vpop.f32.mrf.mxu0
        %813 = vdwg.mxu0
        %814 = vst.msk [vmem:[%s315] sm:$0xff] %vm374, %v671
        %815 = vst.msk [vmem:[%s315 + $0x8] sm:$0xff] %vm374, %v717
        %816 = vst.msk [vmem:[%s315 + $0x10] sm:$0xff] %vm374, %v763
        %817 = vst.msk [vmem:[%s315 + $0x18] sm:$0xff] %vm374, %v809
        %s818 = sand.u32 %s130, 1
        %s819 = scalar_lea.sflag [#allocation6], %s818
        %s820 = sand.u32 %s130, 1
        %s821 = smul.addr %s820, 32
        %s822 = scalar_lea.vmem [#allocation10], %s821
        %s823 = sand.u32 %s158, 1
        %s824 = scalar_lea.sflag [#allocation12], %s823
        %s825 = sand.u32 %s158, 1
        %s826 = smul.addr %s825, 16
        %s827 = scalar_lea.vmem [#allocation11], %s826
        // Predicated region
        $region49: #{tpu_custom_call.1} parent=31 // pred_check
          %p828 = pneg %p140
        $region50: #{tpu_custom_call.1} parent=31 // pred_check_branch
          %830 = sbr.rel (%p828) target = $region52
        $region51: #{tpu_custom_call.1} parent=31 // pred_region
          %s831 = smul.u32 4, %s32
          %s833 = ssub.s32 512, 512
          %834 = vsyncadd %s819, %s833
          %s835 = sadd.s32 %s33, %s831
          %s836 = smul.addr %s835, 128
          %s837 = scalar_lea.hbm %s3, %s836
          %s838 = sshll.u32 %s822, 4
          %s839 = int_to_ptr.vmem [resolvable:$true] %s838
          %844 = dma.vmem_to_hbm [thread:$0]  %s839, 512, %s837, %s819, 128, 128, 8
        $region52: #{tpu_custom_call.1} parent=31 // pred_fallthru
          _
        // Predicated region
        $region53: #{tpu_custom_call.1} parent=31 // pred_check
          %p845 = pneg %p168
        $region54: #{tpu_custom_call.1} parent=31 // pred_check_branch
          %847 = sbr.rel (%p845) target = $region56
        $region55: #{tpu_custom_call.1} parent=31 // pred_region
          %s848 = smul.u32 4, %s32
          %s850 = ssub.s32 256, 256
          %851 = vsyncadd %s824, %s850
          %s852 = sadd.s32 %s33, %s848
          %s853 = smul.addr %s852, 64
          %s854 = scalar_lea.hbm %s4, %s853
          %s855 = sshll.u32 %s827, 4
          %s856 = int_to_ptr.vmem [resolvable:$true] %s855
          %861 = dma.vmem_to_hbm [thread:$0]  %s856, 256, %s854, %s824, 64, 64, 4
        $region56: #{tpu_custom_call.1} parent=31 // pred_fallthru
          _
      $region32: #{tpu_custom_call.1} parent=5 // pred_fallthru
        _
      %p862 = scmp.le.s32.totalorder 2, %s23
      // Predicated region
      $region57: #{tpu_custom_call.1} parent=5 // pred_check
        %p863 = pneg %p862
      $region58: #{tpu_custom_call.1} parent=5 // pred_check_branch
        %865 = sbr.rel (%p863) target = $region60
      $region59: #{tpu_custom_call.1} parent=5 // pred_region
        %s866 = ssub.s32 %s23, 2
        // Predicated region
        $region61: #{tpu_custom_call.1} parent=59 // pred_check
          %p867 = pneg %p146
        $region62: #{tpu_custom_call.1} parent=59 // pred_check_branch
          %869 = sbr.rel (%p867) target = $region64
        $region63: #{tpu_custom_call.1} parent=59 // pred_region
          %s870 = sand.u32 %s131, 1
          %s871 = scalar_lea.sflag [#allocation6], %s870
          %s872 = sand.u32 %s131, 1
          %s873 = smul.addr %s872, 32
          %s874 = scalar_lea.vmem [#allocation10], %s873
          %875 = dma.done %s871, 512
        $region64: #{tpu_custom_call.1} parent=59 // pred_fallthru
          _
        // Predicated region
        $region65: #{tpu_custom_call.1} parent=59 // pred_check
          %p876 = pneg %p174
        $region66: #{tpu_custom_call.1} parent=59 // pred_check_branch
          %878 = sbr.rel (%p876) target = $region68
        $region67: #{tpu_custom_call.1} parent=59 // pred_region
          %s879 = sand.u32 %s159, 1
          %s880 = scalar_lea.sflag [#allocation12], %s879
          %s881 = sand.u32 %s159, 1
          %s882 = smul.addr %s881, 16
          %s883 = scalar_lea.vmem [#allocation11], %s882
          %884 = dma.done %s880, 256
        $region68: #{tpu_custom_call.1} parent=59 // pred_fallthru
          _
      $region60: #{tpu_custom_call.1} parent=5 // pred_fallthru
        _
    $region6: #{tpu_custom_call.1} parent=1 // loop_footer
      %s27 = sadd.s32 1, %s23
    $region7: #{tpu_custom_call.1} parent=1 // loop_footer_branch
      %22 = sbr.rel target = $region3
    $region8: #{tpu_custom_call.1} parent=1 // loop_exit
      _
    %885 = vsyncpa [#allocation5], 1
    %s886 = scalar_lea.sflag [#allocation5], 1
    %887 = vsyncpa %s886, 1
    %888 = vsyncpa [#allocation8], 1
    %s889 = scalar_lea.sflag [#allocation8], 1
    %890 = vsyncpa %s889, 1
    %891 = vsyncpa [#allocation6], 1
    %s892 = scalar_lea.sflag [#allocation6], 1
    %893 = vsyncpa %s892, 1
    %894 = vsyncpa [#allocation12], 1
    %s895 = scalar_lea.sflag [#allocation12], 1
    %896 = vsyncpa %s895, 1

</llo_original>
